<compile_context>
chip_gen: v6e
topology: v6e:2x2x1
jax: 0.10.0
libtpu: 0.0.40
codegen_flags: <defaults>
</compile_context>

<pallas_src>
import functools

import jax
import jax.numpy as jnp
from jax.experimental import pallas as pl
from jax.experimental.pallas import tpu as pltpu

_LANES = 128
# 8192 rows * 128 lanes * 4 B = 4 MiB per f32 input block; 2 inputs x 2 pipeline
# buffers = 16 MiB double-buffered footprint (needs vmem_limit_bytes on v5e).
_MAX_TILE_ROWS = 8192


def _bce_dice_kernel(pred_ref, target_ref, acc_ref, *, pos_weight, n_pixels,
                     tile_rows, tiles_per_chunk, any_tail):
    """Accumulates per-(sample, chunk) [bce_sum, intersection, union] partials.

    pred_ref / target_ref : (1, tile_rows, 128) f32 or bf16 tiles
    acc_ref               : (1, 3, 8, 128) f32 output block, resident across the
                            innermost (reduction) grid axis -> accumulator
    """
    c_idx = pl.program_id(1)
    t_idx = pl.program_id(2)

    @pl.when(t_idx == 0)
    def _init():
        acc_ref[...] = jnp.zeros_like(acc_ref)

    # Upcast per-tile on the VPU so bf16 inputs stay narrow over HBM->VMEM.
    x = pred_ref[0].astype(jnp.float32)
    t = target_ref[0].astype(jnp.float32)

    def accumulate(mask):
        # Numerically stable BCE-with-logits, refactored to
        #   (1 + (w-1) t) * log1p(e) + w t relu(-x) + (1 - t) relu(x),  e = exp(-|x|)
        # (= relu(x) - x t + log1p(e) for w == 1): ~4-6 VPU ops/pixel instead of
        # ~12 via explicit log_sigmoid terms.  Two EUP transcendentals per pixel
        # (exp + log1p); e is reused for the sigmoid below (no second exp).
        e = jnp.exp(-jnp.abs(x))
        log1p_e = jnp.log1p(e)
        relu_x = jnp.maximum(x, 0.0)
        if pos_weight == 1.0:
            bce_px = relu_x - x * t + log1p_e
        else:
            w = jnp.float32(pos_weight)
            relu_nx = jnp.maximum(-x, 0.0)
            bce_px = ((1.0 + (w - 1.0) * t) * log1p_e
                      + (w * t) * relu_nx + (1.0 - t) * relu_x)

        # sigmoid(x) from the same e: approx reciprocal on the (otherwise idle)
        # EUP + one Newton step (~1e-8 rel error) instead of an exact VPU divide.
        d = 1.0 + e
        r = pl.reciprocal(d, approx=True)
        r = r * (2.0 - d * r)
        p = jnp.where(x >= 0.0, r, e * r)          # sigmoid(x)

        inter_px = p * t
        union_px = p + t
        if mask is not None:
            bce_px = jnp.where(mask, bce_px, 0.0)
            inter_px = jnp.where(mask, inter_px, 0.0)
            union_px = jnp.where(mask, union_px, 0.0)

        def fold(v):
            # (tile_rows, 128) -> (8, 128): pure vreg-wise VPU adds; the expensive
            # cross-lane/sublane reduction happens once per sample in the wrapper.
            return v.reshape(tile_rows // 8, 8, _LANES).sum(axis=0)

        acc_ref[0, 0] = acc_ref[0, 0] + fold(bce_px)      # sum of per-pixel BCE
        acc_ref[0, 1] = acc_ref[0, 1] + fold(inter_px)    # intersection
        acc_ref[0, 2] = acc_ref[0, 2] + fold(union_px)    # union

    if not any_tail:
        # Trace-time fast path: every logical tile is full of real pixels.
        accumulate(None)
    else:
        logical_tile = c_idx * tiles_per_chunk + t_idx
        tile_end = (logical_tile + 1) * (tile_rows * _LANES)
        is_tail = tile_end > n_pixels

        @pl.when(jnp.logical_not(is_tail))
        def _full():
            accumulate(None)

        @pl.when(is_tail)
        def _tail():
            # Mask pixels (padding, partial last block, redundant clamped tiles)
            # whose flat index is >= the true H*W.  jnp.where also discards any
            # garbage values from a partial array-edge block.
            row_iota = jax.lax.broadcasted_iota(jnp.int32, (tile_rows, _LANES), 0)
            lane_iota = jax.lax.broadcasted_iota(jnp.int32, (tile_rows, _LANES), 1)
            flat = (logical_tile * tile_rows + row_iota) * _LANES + lane_iota
            accumulate(flat < n_pixels)


def bce_dice_loss(pred, target, pos_weight=1.0, reduction=False, smooth=1e-5,
                  max_tile_rows=_MAX_TILE_ROWS):
    """JAX/Pallas equivalent of BceDiceLoss.forward (NCHW with C == 1, or (B,H,W))."""
    pred = jnp.asarray(pred)
    target = jnp.asarray(target)
    # The module casts to float32; we keep f32/bf16 inputs native through the
    # HBM->VMEM pipe (bf16 halves DMA bytes) and upcast per-tile in the kernel.
    if pred.dtype not in (jnp.float32, jnp.bfloat16):
        pred = pred.astype(jnp.float32)
    if target.dtype not in (jnp.float32, jnp.bfloat16):
        target = target.astype(jnp.float32)

    # PyTorch uses .squeeze() (drops *all* size-1 dims); drop only the channel
    # dim so a batch of 1 keeps its batch axis.
    if pred.ndim == 4:
        assert pred.shape[1] == 1, "expected a single channel"
        pred = jnp.squeeze(pred, axis=1)
        target = jnp.squeeze(target, axis=1)
    assert pred.ndim == 3 and pred.shape == target.shape, "expect (B, H, W)"

    b, h, w = pred.shape
    n = h * w

    # Lane-dense layout: flatten (H, W) to (rows, 128).  Sublane alignment: 8
    # for f32 tiles, 16 if any kernel input is bf16.
    any_bf16 = (pred.dtype == jnp.bfloat16) or (target.dtype == jnp.bfloat16)
    align = 16 if any_bf16 else 8
    rows = pl.cdiv(n, _LANES)
    rows_pad = ((rows + align - 1) // align) * align
    n_pad = rows_pad * _LANES

    predf = pred.reshape(b, n)
    targf = target.reshape(b, n)
    if n_pad != n:
        # Pad only up to the next (align*128) multiple (zero-copy when H*W already
        # is one); padded pixels are excluded by the in-kernel tail mask so the
        # pad value is irrelevant.
        predf = jnp.pad(predf, ((0, 0), (0, n_pad - n)))
        targf = jnp.pad(targf, ((0, 0), (0, n_pad - n)))
    pred3 = predf.reshape(b, rows_pad, _LANES)
    targ3 = targf.reshape(b, rows_pad, _LANES)

    tile_rows = min(max_tile_rows, rows_pad)
    tile_rows = max(align, (tile_rows // align) * align)
    num_tiles = pl.cdiv(rows_pad, tile_rows)
    # v7x has 2 TensorCores: a second "parallel" axis over spatial chunks keeps
    # both busy even when B == 1.  Neutral on single-TC v5e/v6e.
    n_chunks = 2 if num_tiles >= 2 else 1
    tiles_per_chunk = pl.cdiv(num_tiles, n_chunks)
    # Trace-time: does any grid step need the masked tail path?
    any_tail = (n_chunks * tiles_per_chunk * tile_rows * _LANES) != n

    last_block = num_tiles - 1

    def in_map(bi, ci, ti):
        # Clamp redundant trailing tiles of the last chunk onto the last real
        # block; their contribution is fully masked out in the kernel.
        return (bi, jnp.minimum(ci * tiles_per_chunk + ti, last_block), 0)

    kernel = functools.partial(
        _bce_dice_kernel,
        pos_weight=float(pos_weight), n_pixels=n, tile_rows=tile_rows,
        tiles_per_chunk=tiles_per_chunk, any_tail=any_tail)

    acc = pl.pallas_call(
        kernel,
        out_shape=jax.ShapeDtypeStruct((b * n_chunks, 3, 8, _LANES), jnp.float32),
        grid_spec=pltpu.PrefetchScalarGridSpec(
            num_scalar_prefetch=0,
            grid=(b, n_chunks, tiles_per_chunk),
            in_specs=[
                pl.BlockSpec((1, tile_rows, _LANES), in_map),
                pl.BlockSpec((1, tile_rows, _LANES), in_map),
            ],
            out_specs=pl.BlockSpec(
                (1, 3, 8, _LANES),
                lambda bi, ci, ti: (bi * n_chunks + ci, 0, 0, 0)),
        ),
        compiler_params=pltpu.CompilerParams(
            dimension_semantics=("parallel", "parallel", "arbitrary"),
            vmem_limit_bytes=48 << 20),
    )(pred3, targ3)

    # Tiny final reductions + dice glue in plain JAX (b * n_chunks * 3 * 1024 floats).
    sums = jnp.sum(acc.reshape(b, n_chunks, 3, -1), axis=(1, 3))     # (B, 3)
    bce = sums[:, 0] / float(n)
    intersection = sums[:, 1]
    union = sums[:, 2]
    dice = 2.0 * (intersection + smooth) / (union + smooth)
    dice_loss = 1.0 - dice
    loss = bce + dice_loss
    if reduction:
        return loss, bce, dice_loss
    return jnp.mean(loss)


def _reference(pred, target, pos_weight=1.0, smooth=1e-5, reduction=False):
    """Pure-JAX reference (matches F.binary_cross_entropy_with_logits + dice)."""
    pred = jnp.squeeze(jnp.asarray(pred, jnp.float32), axis=1)
    target = jnp.squeeze(jnp.asarray(target, jnp.float32), axis=1)
    log1p_term = jnp.log1p(jnp.exp(-jnp.abs(pred)))
    log_sig = -(jnp.maximum(-pred, 0.0) + log1p_term)
    log_1m = -(jnp.maximum(pred, 0.0) + log1p_term)
    bce_px = -(pos_weight * target * log_sig + (1.0 - target) * log_1m)
    bce = bce_px.mean(axis=(-1, -2))
    p = jax.nn.sigmoid(pred)
    inter = (p * target).sum(axis=(-1, -2))
    union = (p + target).sum(axis=(-1, -2))
    dice = 2.0 * (inter + smooth) / (union + smooth)
    dice_loss = 1.0 - dice
    loss = bce + dice_loss
    if reduction:
        return loss, bce, dice_loss
    return jnp.mean(loss)


if __name__ == "__main__":
    key = jax.random.PRNGKey(0)
    k1, k2, k3, k4, k5, k6, k7, k8, k9, k10 = jax.random.split(key, 10)

    # Case 1: NCHW with C == 1 (module's squeeze path), pos_weight != 1, tail mask.
    pred = jax.random.normal(k1, (2, 1, 16, 16), dtype=jnp.float32)
    target = jax.random.bernoulli(k2, 0.5, (2, 1, 16, 16)).astype(jnp.float32)
    out = jax.block_until_ready(bce_dice_loss(pred, target, pos_weight=2.0))
    ref = _reference(pred, target, pos_weight=2.0)
    assert jnp.allclose(out, ref, atol=1e-5, rtol=1e-5), (out, ref)

    # reduction=True path (per-sample (loss, bce, dice_loss)).
    loss_b, bce_b, dice_b = bce_dice_loss(pred, target, pos_weight=2.0, reduction=True)
    rl, rb, rd = _reference(pred, target, pos_weight=2.0, reduction=True)
    jax.block_until_ready((loss_b, bce_b, dice_b))
    assert jnp.allclose(loss_b, rl, atol=1e-5, rtol=1e-5), (loss_b, rl)
    assert jnp.allclose(bce_b, rb, atol=1e-5, rtol=1e-5), (bce_b, rb)
    assert jnp.allclose(dice_b, rd, atol=1e-5, rtol=1e-5), (dice_b, rd)

    # Case 2: ragged spatial size (H*W not a multiple of 128): padding + tail mask.
    pred2 = jax.random.normal(k3, (2, 1, 20, 24), dtype=jnp.float32)
    target2 = jax.random.bernoulli(k4, 0.5, (2, 1, 20, 24)).astype(jnp.float32)
    out2 = jax.block_until_ready(bce_dice_loss(pred2, target2))
    ref2 = _reference(pred2, target2)
    assert jnp.allclose(out2, ref2, atol=1e-5, rtol=1e-5), (out2, ref2)

    # Case 3: B == 1, multi-tile grid, two spatial chunks, zero-copy unmasked path
    # (small max_tile_rows only to exercise the chunked grid at test shapes).
    pred3 = jax.random.normal(k5, (1, 1, 64, 64), dtype=jnp.float32)
    target3 = jax.random.bernoulli(k6, 0.3, (1, 1, 64, 64)).astype(jnp.float32)
    out3 = jax.block_until_ready(bce_dice_loss(pred3, target3, max_tile_rows=8))
    ref3 = _reference(pred3, target3)
    assert jnp.allclose(out3, ref3, atol=1e-5, rtol=1e-5), (out3, ref3)

    # Case 4: odd tile count -> redundant clamped tile in the last chunk + tail mask.
    pred4 = jax.random.normal(k7, (2, 1, 80, 80), dtype=jnp.float32)
    target4 = jax.random.bernoulli(k8, 0.5, (2, 1, 80, 80)).astype(jnp.float32)
    out4 = jax.block_until_ready(bce_dice_loss(pred4, target4, max_tile_rows=8))
    ref4 = _reference(pred4, target4)
    assert jnp.allclose(out4, ref4, atol=1e-5, rtol=1e-5), (out4, ref4)

    # Case 5: bf16 inputs stay bf16 through the DMA pipe, upcast per-tile in-kernel.
    pred5 = jax.random.normal(k9, (2, 1, 32, 32), dtype=jnp.float32).astype(jnp.bfloat16)
    target5 = jax.random.bernoulli(k10, 0.5, (2, 1, 32, 32)).astype(jnp.bfloat16)
    out5 = jax.block_until_ready(bce_dice_loss(pred5, target5))
    ref5 = _reference(pred5, target5)
    assert jnp.allclose(out5, ref5, atol=1e-5, rtol=1e-5), (out5, ref5)

    print("KERNEL_OK")
</pallas_src>

<mosaic_0001>
module attributes {stable_mosaic.version = 11 : i64} {
  func.func @_bce_dice_kernel(%arg0: i32, %arg1: i32, %arg2: i32, %arg3: memref<1x8x128xf32, #tpu.memory_space<vmem>>, %arg4: memref<1x8x128xf32, #tpu.memory_space<vmem>>, %arg5: memref<1x3x8x128xf32, #tpu.memory_space<vmem>>) attributes {dimension_semantics = [#tpu.dimension_semantics<parallel>, #tpu.dimension_semantics<parallel>, #tpu.dimension_semantics<arbitrary>], iteration_bounds = array<i64: 2, 1, 1>, scalar_prefetch = 0 : i64, scratch_operands = 0 : i64, tpu.core_type = #tpu.core_type<tc>, window_params = [{transform_indices = @transform_0, window_bounds = array<i64: 1, 8, 128>}, {transform_indices = @transform_1, window_bounds = array<i64: 1, 8, 128>}, {transform_indices = @transform_2, window_bounds = array<i64: 1, 3, 8, 128>}]} {
    %c0_i32 = arith.constant 0 : i32
    %0 = arith.cmpi eq, %arg2, %c0_i32 : i32
    %1 = arith.extui %0 : i1 to i32
    %c0_i32_0 = arith.constant 0 : i32
    %2 = arith.cmpi ne, %1, %c0_i32_0 : i32
    scf.if %2 {
      %cst = arith.constant 0.000000e+00 : f32
      %17 = vector.broadcast %cst : f32 to vector<1x3x8x128xf32>
      %c0_9 = arith.constant 0 : index
      %c0_10 = arith.constant 0 : index
      %c0_11 = arith.constant 0 : index
      %c0_12 = arith.constant 0 : index
      %18 = vector.load %arg5[%c0_9, %c0_10, %c0_11, %c0_12] : memref<1x3x8x128xf32, #tpu.memory_space<vmem>>, vector<1x3x8x128xf32>
      tpu.vector_store %arg5[%c0_9, %c0_10, %c0_11, %c0_12], %17 {strides = array<i32>} : memref<1x3x8x128xf32, #tpu.memory_space<vmem>>, vector<1x3x8x128xf32>,
    } else {
    }
    %c0 = arith.constant 0 : index
    %c0_1 = arith.constant 0 : index
    %c0_2 = arith.constant 0 : index
    %3 = vector.load %arg3[%c0, %c0_1, %c0_2] : memref<1x8x128xf32, #tpu.memory_space<vmem>>, vector<1x8x128xf32>
    %4 = vector.shape_cast %3 : vector<1x8x128xf32> to vector<8x128xf32>
    %c0_3 = arith.constant 0 : index
    %c0_4 = arith.constant 0 : index
    %c0_5 = arith.constant 0 : index
    %5 = vector.load %arg4[%c0_3, %c0_4, %c0_5] : memref<1x8x128xf32, #tpu.memory_space<vmem>>, vector<1x8x128xf32>
    %6 = vector.shape_cast %5 : vector<1x8x128xf32> to vector<8x128xf32>
    %c1_i32 = arith.constant 1 : i32
    %7 = arith.muli %arg1, %c1_i32 : i32
    %8 = arith.addi %7, %arg2 : i32
    %c1_i32_6 = arith.constant 1 : i32
    %9 = arith.addi %8, %c1_i32_6 : i32
    %c1024_i32 = arith.constant 1024 : i32
    %10 = arith.muli %9, %c1024_i32 : i32
    %c256_i32 = arith.constant 256 : i32
    %11 = arith.cmpi sgt, %10, %c256_i32 : i32
    %true = arith.constant true
    %12 = arith.xori %11, %true : i1
    %13 = arith.extui %12 : i1 to i32
    %c0_i32_7 = arith.constant 0 : i32
    %14 = arith.cmpi ne, %13, %c0_i32_7 : i32
    scf.if %14 {
      %17 = math.absf %4 : vector<8x128xf32>
      %cst = arith.constant 0.000000e+00 : f32
      %18 = vector.broadcast %cst : f32 to vector<8x128xf32>
      %19 = arith.subf %18, %17 : vector<8x128xf32>
      %20 = math.exp %19 : vector<8x128xf32>
      %21 = math.log1p %20 : vector<8x128xf32>
      %cst_9 = arith.constant 0.000000e+00 : f32
      %22 = vector.broadcast %cst_9 : f32 to vector<8x128xf32>
      %23 = arith.maximumf %4, %22 : vector<8x128xf32>
      %cst_10 = arith.constant 0.000000e+00 : f32
      %24 = vector.broadcast %cst_10 : f32 to vector<8x128xf32>
      %25 = arith.subf %24, %4 : vector<8x128xf32>
      %cst_11 = arith.constant 0.000000e+00 : f32
      %26 = vector.broadcast %cst_11 : f32 to vector<8x128xf32>
      %27 = arith.maximumf %25, %26 : vector<8x128xf32>
      %cst_12 = arith.constant 2.000000e+00 : f32
      %cst_13 = arith.constant 1.000000e+00 : f32
      %28 = arith.subf %cst_12, %cst_13 : f32
      %29 = vector.broadcast %28 : f32 to vector<8x128xf32>
      %30 = arith.mulf %29, %6 : vector<8x128xf32>
      %cst_14 = arith.constant 1.000000e+00 : f32
      %31 = vector.broadcast %cst_14 : f32 to vector<8x128xf32>
      %32 = arith.addf %31, %30 : vector<8x128xf32>
      %33 = arith.mulf %32, %21 : vector<8x128xf32>
      %cst_15 = arith.constant 2.000000e+00 : f32
      %34 = vector.broadcast %cst_15 : f32 to vector<8x128xf32>
      %35 = arith.mulf %34, %6 : vector<8x128xf32>
      %36 = arith.mulf %35, %27 : vector<8x128xf32>
      %37 = arith.addf %33, %36 : vector<8x128xf32>
      %cst_16 = arith.constant 1.000000e+00 : f32
      %38 = vector.broadcast %cst_16 : f32 to vector<8x128xf32>
      %39 = arith.subf %38, %6 : vector<8x128xf32>
      %40 = arith.mulf %39, %23 : vector<8x128xf32>
      %41 = arith.addf %37, %40 : vector<8x128xf32>
      %cst_17 = arith.constant 1.000000e+00 : f32
      %42 = vector.broadcast %cst_17 : f32 to vector<8x128xf32>
      %43 = arith.addf %42, %20 : vector<8x128xf32>
      %44 = tpu.reciprocal %43 {approx = true} : vector<8x128xf32> -> vector<8x128xf32>
      %45 = arith.mulf %43, %44 : vector<8x128xf32>
      %cst_18 = arith.constant 2.000000e+00 : f32
      %46 = vector.broadcast %cst_18 : f32 to vector<8x128xf32>
      %47 = arith.subf %46, %45 : vector<8x128xf32>
      %48 = arith.mulf %44, %47 : vector<8x128xf32>
      %cst_19 = arith.constant 0.000000e+00 : f32
      %49 = vector.broadcast %cst_19 : f32 to vector<8x128xf32>
      %50 = arith.cmpf oge, %4, %49 : vector<8x128xf32>
      %51 = arith.mulf %20, %48 : vector<8x128xf32>
      %52 = arith.select %50, %48, %51 : vector<8x128xi1>, vector<8x128xf32>
      %53 = arith.mulf %52, %6 : vector<8x128xf32>
      %54 = arith.addf %52, %6 : vector<8x128xf32>
      %c0_20 = arith.constant 0 : index
      %c0_21 = arith.constant 0 : index
      %c0_22 = arith.constant 0 : index
      %c0_23 = arith.constant 0 : index
      %55 = vector.load %arg5[%c0_20, %c0_21, %c0_22, %c0_23] : memref<1x3x8x128xf32, #tpu.memory_space<vmem>>, vector<1x1x8x128xf32>
      %56 = vector.shape_cast %55 : vector<1x1x8x128xf32> to vector<8x128xf32>
      %57 = vector.shape_cast %41 : vector<8x128xf32> to vector<1x8x128xf32>
      %cst_24 = arith.constant dense<0.000000e+00> : vector<8x128xf32>
      %58 = vector.multi_reduction <add>, %57, %cst_24 [0] : vector<1x8x128xf32> to vector<8x128xf32>
      %59 = arith.addf %56, %58 : vector<8x128xf32>
      %c0_25 = arith.constant 0 : index
      %c0_26 = arith.constant 0 : index
      %c0_27 = arith.constant 0 : index
      %c0_28 = arith.constant 0 : index
      %60 = vector.load %arg5[%c0_25, %c0_26, %c0_27, %c0_28] : memref<1x3x8x128xf32, #tpu.memory_space<vmem>>, vector<1x1x8x128xf32>
      %61 = vector.shape_cast %60 : vector<1x1x8x128xf32> to vector<8x128xf32>
      %62 = vector.shape_cast %59 : vector<8x128xf32> to vector<1x1x8x128xf32>
      tpu.vector_store %arg5[%c0_25, %c0_26, %c0_27, %c0_28], %62 {strides = array<i32>} : memref<1x3x8x128xf32, #tpu.memory_space<vmem>>, vector<1x1x8x128xf32>,
      %c0_29 = arith.constant 0 : index
      %c1 = arith.constant 1 : index
      %c0_30 = arith.constant 0 : index
      %c0_31 = arith.constant 0 : index
      %63 = vector.load %arg5[%c0_29, %c1, %c0_30, %c0_31] : memref<1x3x8x128xf32, #tpu.memory_space<vmem>>, vector<1x1x8x128xf32>
      %64 = vector.shape_cast %63 : vector<1x1x8x128xf32> to vector<8x128xf32>
      %65 = vector.shape_cast %53 : vector<8x128xf32> to vector<1x8x128xf32>
      %cst_32 = arith.constant dense<0.000000e+00> : vector<8x128xf32>
      %66 = vector.multi_reduction <add>, %65, %cst_32 [0] : vector<1x8x128xf32> to vector<8x128xf32>
      %67 = arith.addf %64, %66 : vector<8x128xf32>
      %c0_33 = arith.constant 0 : index
      %c1_34 = arith.constant 1 : index
      %c0_35 = arith.constant 0 : index
      %c0_36 = arith.constant 0 : index
      %68 = vector.load %arg5[%c0_33, %c1_34, %c0_35, %c0_36] : memref<1x3x8x128xf32, #tpu.memory_space<vmem>>, vector<1x1x8x128xf32>
      %69 = vector.shape_cast %68 : vector<1x1x8x128xf32> to vector<8x128xf32>
      %70 = vector.shape_cast %67 : vector<8x128xf32> to vector<1x1x8x128xf32>
      tpu.vector_store %arg5[%c0_33, %c1_34, %c0_35, %c0_36], %70 {strides = array<i32>} : memref<1x3x8x128xf32, #tpu.memory_space<vmem>>, vector<1x1x8x128xf32>,
      %c0_37 = arith.constant 0 : index
      %c2 = arith.constant 2 : index
      %c0_38 = arith.constant 0 : index
      %c0_39 = arith.constant 0 : index
      %71 = vector.load %arg5[%c0_37, %c2, %c0_38, %c0_39] : memref<1x3x8x128xf32, #tpu.memory_space<vmem>>, vector<1x1x8x128xf32>
      %72 = vector.shape_cast %71 : vector<1x1x8x128xf32> to vector<8x128xf32>
      %73 = vector.shape_cast %54 : vector<8x128xf32> to vector<1x8x128xf32>
      %cst_40 = arith.constant dense<0.000000e+00> : vector<8x128xf32>
      %74 = vector.multi_reduction <add>, %73, %cst_40 [0] : vector<1x8x128xf32> to vector<8x128xf32>
      %75 = arith.addf %72, %74 : vector<8x128xf32>
      %c0_41 = arith.constant 0 : index
      %c2_42 = arith.constant 2 : index
      %c0_43 = arith.constant 0 : index
      %c0_44 = arith.constant 0 : index
      %76 = vector.load %arg5[%c0_41, %c2_42, %c0_43, %c0_44] : memref<1x3x8x128xf32, #tpu.memory_space<vmem>>, vector<1x1x8x128xf32>
      %77 = vector.shape_cast %76 : vector<1x1x8x128xf32> to vector<8x128xf32>
      %78 = vector.shape_cast %75 : vector<8x128xf32> to vector<1x1x8x128xf32>
      tpu.vector_store %arg5[%c0_41, %c2_42, %c0_43, %c0_44], %78 {strides = array<i32>} : memref<1x3x8x128xf32, #tpu.memory_space<vmem>>, vector<1x1x8x128xf32>,
    } else {
    }
    %15 = arith.extui %11 : i1 to i32
    %c0_i32_8 = arith.constant 0 : i32
    %16 = arith.cmpi ne, %15, %c0_i32_8 : i32
    scf.if %16 {
      %17 = tpu.iota {dimensions = array<i32: 0>} : vector<8x128xi32>
      %18 = tpu.iota {dimensions = array<i32: 1>} : vector<8x128xi32>
      %c8_i32 = arith.constant 8 : i32
      %19 = arith.muli %8, %c8_i32 : i32
      %20 = vector.broadcast %19 : i32 to vector<8x128xi32>
      %21 = arith.addi %20, %17 : vector<8x128xi32>
      %c128_i32 = arith.constant 128 : i32
      %22 = vector.broadcast %c128_i32 : i32 to vector<8x128xi32>
      %23 = arith.muli %21, %22 : vector<8x128xi32>
      %24 = arith.addi %23, %18 : vector<8x128xi32>
      %c256_i32_9 = arith.constant 256 : i32
      %25 = vector.broadcast %c256_i32_9 : i32 to vector<8x128xi32>
      %26 = arith.cmpi slt, %24, %25 : vector<8x128xi32>
      %27 = math.absf %4 : vector<8x128xf32>
      %cst = arith.constant 0.000000e+00 : f32
      %28 = vector.broadcast %cst : f32 to vector<8x128xf32>
      %29 = arith.subf %28, %27 : vector<8x128xf32>
      %30 = math.exp %29 : vector<8x128xf32>
      %31 = math.log1p %30 : vector<8x128xf32>
      %cst_10 = arith.constant 0.000000e+00 : f32
      %32 = vector.broadcast %cst_10 : f32 to vector<8x128xf32>
      %33 = arith.maximumf %4, %32 : vector<8x128xf32>
      %cst_11 = arith.constant 0.000000e+00 : f32
      %34 = vector.broadcast %cst_11 : f32 to vector<8x128xf32>
      %35 = arith.subf %34, %4 : vector<8x128xf32>
      %cst_12 = arith.constant 0.000000e+00 : f32
      %36 = vector.broadcast %cst_12 : f32 to vector<8x128xf32>
      %37 = arith.maximumf %35, %36 : vector<8x128xf32>
      %cst_13 = arith.constant 2.000000e+00 : f32
      %cst_14 = arith.constant 1.000000e+00 : f32
      %38 = arith.subf %cst_13, %cst_14 : f32
      %39 = vector.broadcast %38 : f32 to vector<8x128xf32>
      %40 = arith.mulf %39, %6 : vector<8x128xf32>
      %cst_15 = arith.constant 1.000000e+00 : f32
      %41 = vector.broadcast %cst_15 : f32 to vector<8x128xf32>
      %42 = arith.addf %41, %40 : vector<8x128xf32>
      %43 = arith.mulf %42, %31 : vector<8x128xf32>
      %cst_16 = arith.constant 2.000000e+00 : f32
      %44 = vector.broadcast %cst_16 : f32 to vector<8x128xf32>
      %45 = arith.mulf %44, %6 : vector<8x128xf32>
      %46 = arith.mulf %45, %37 : vector<8x128xf32>
      %47 = arith.addf %43, %46 : vector<8x128xf32>
      %cst_17 = arith.constant 1.000000e+00 : f32
      %48 = vector.broadcast %cst_17 : f32 to vector<8x128xf32>
      %49 = arith.subf %48, %6 : vector<8x128xf32>
      %50 = arith.mulf %49, %33 : vector<8x128xf32>
      %51 = arith.addf %47, %50 : vector<8x128xf32>
      %cst_18 = arith.constant 1.000000e+00 : f32
      %52 = vector.broadcast %cst_18 : f32 to vector<8x128xf32>
      %53 = arith.addf %52, %30 : vector<8x128xf32>
      %54 = tpu.reciprocal %53 {approx = true} : vector<8x128xf32> -> vector<8x128xf32>
      %55 = arith.mulf %53, %54 : vector<8x128xf32>
      %cst_19 = arith.constant 2.000000e+00 : f32
      %56 = vector.broadcast %cst_19 : f32 to vector<8x128xf32>
      %57 = arith.subf %56, %55 : vector<8x128xf32>
      %58 = arith.mulf %54, %57 : vector<8x128xf32>
      %cst_20 = arith.constant 0.000000e+00 : f32
      %59 = vector.broadcast %cst_20 : f32 to vector<8x128xf32>
      %60 = arith.cmpf oge, %4, %59 : vector<8x128xf32>
      %61 = arith.mulf %30, %58 : vector<8x128xf32>
      %62 = arith.select %60, %58, %61 : vector<8x128xi1>, vector<8x128xf32>
      %63 = arith.mulf %62, %6 : vector<8x128xf32>
      %64 = arith.addf %62, %6 : vector<8x128xf32>
      %cst_21 = arith.constant 0.000000e+00 : f32
      %65 = vector.broadcast %cst_21 : f32 to vector<8x128xf32>
      %66 = arith.select %26, %51, %65 : vector<8x128xi1>, vector<8x128xf32>
      %cst_22 = arith.constant 0.000000e+00 : f32
      %67 = vector.broadcast %cst_22 : f32 to vector<8x128xf32>
      %68 = arith.select %26, %63, %67 : vector<8x128xi1>, vector<8x128xf32>
      %cst_23 = arith.constant 0.000000e+00 : f32
      %69 = vector.broadcast %cst_23 : f32 to vector<8x128xf32>
      %70 = arith.select %26, %64, %69 : vector<8x128xi1>, vector<8x128xf32>
      %c0_24 = arith.constant 0 : index
      %c0_25 = arith.constant 0 : index
      %c0_26 = arith.constant 0 : index
      %c0_27 = arith.constant 0 : index
      %71 = vector.load %arg5[%c0_24, %c0_25, %c0_26, %c0_27] : memref<1x3x8x128xf32, #tpu.memory_space<vmem>>, vector<1x1x8x128xf32>
      %72 = vector.shape_cast %71 : vector<1x1x8x128xf32> to vector<8x128xf32>
      %73 = vector.shape_cast %66 : vector<8x128xf32> to vector<1x8x128xf32>
      %cst_28 = arith.constant dense<0.000000e+00> : vector<8x128xf32>
      %74 = vector.multi_reduction <add>, %73, %cst_28 [0] : vector<1x8x128xf32> to vector<8x128xf32>
      %75 = arith.addf %72, %74 : vector<8x128xf32>
      %c0_29 = arith.constant 0 : index
      %c0_30 = arith.constant 0 : index
      %c0_31 = arith.constant 0 : index
      %c0_32 = arith.constant 0 : index
      %76 = vector.load %arg5[%c0_29, %c0_30, %c0_31, %c0_32] : memref<1x3x8x128xf32, #tpu.memory_space<vmem>>, vector<1x1x8x128xf32>
      %77 = vector.shape_cast %76 : vector<1x1x8x128xf32> to vector<8x128xf32>
      %78 = vector.shape_cast %75 : vector<8x128xf32> to vector<1x1x8x128xf32>
      tpu.vector_store %arg5[%c0_29, %c0_30, %c0_31, %c0_32], %78 {strides = array<i32>} : memref<1x3x8x128xf32, #tpu.memory_space<vmem>>, vector<1x1x8x128xf32>,
      %c0_33 = arith.constant 0 : index
      %c1 = arith.constant 1 : index
      %c0_34 = arith.constant 0 : index
      %c0_35 = arith.constant 0 : index
      %79 = vector.load %arg5[%c0_33, %c1, %c0_34, %c0_35] : memref<1x3x8x128xf32, #tpu.memory_space<vmem>>, vector<1x1x8x128xf32>
      %80 = vector.shape_cast %79 : vector<1x1x8x128xf32> to vector<8x128xf32>
      %81 = vector.shape_cast %68 : vector<8x128xf32> to vector<1x8x128xf32>
      %cst_36 = arith.constant dense<0.000000e+00> : vector<8x128xf32>
      %82 = vector.multi_reduction <add>, %81, %cst_36 [0] : vector<1x8x128xf32> to vector<8x128xf32>
      %83 = arith.addf %80, %82 : vector<8x128xf32>
      %c0_37 = arith.constant 0 : index
      %c1_38 = arith.constant 1 : index
      %c0_39 = arith.constant 0 : index
      %c0_40 = arith.constant 0 : index
      %84 = vector.load %arg5[%c0_37, %c1_38, %c0_39, %c0_40] : memref<1x3x8x128xf32, #tpu.memory_space<vmem>>, vector<1x1x8x128xf32>
      %85 = vector.shape_cast %84 : vector<1x1x8x128xf32> to vector<8x128xf32>
      %86 = vector.shape_cast %83 : vector<8x128xf32> to vector<1x1x8x128xf32>
      tpu.vector_store %arg5[%c0_37, %c1_38, %c0_39, %c0_40], %86 {strides = array<i32>} : memref<1x3x8x128xf32, #tpu.memory_space<vmem>>, vector<1x1x8x128xf32>,
      %c0_41 = arith.constant 0 : index
      %c2 = arith.constant 2 : index
      %c0_42 = arith.constant 0 : index
      %c0_43 = arith.constant 0 : index
      %87 = vector.load %arg5[%c0_41, %c2, %c0_42, %c0_43] : memref<1x3x8x128xf32, #tpu.memory_space<vmem>>, vector<1x1x8x128xf32>
      %88 = vector.shape_cast %87 : vector<1x1x8x128xf32> to vector<8x128xf32>
      %89 = vector.shape_cast %70 : vector<8x128xf32> to vector<1x8x128xf32>
      %cst_44 = arith.constant dense<0.000000e+00> : vector<8x128xf32>
      %90 = vector.multi_reduction <add>, %89, %cst_44 [0] : vector<1x8x128xf32> to vector<8x128xf32>
      %91 = arith.addf %88, %90 : vector<8x128xf32>
      %c0_45 = arith.constant 0 : index
      %c2_46 = arith.constant 2 : index
      %c0_47 = arith.constant 0 : index
      %c0_48 = arith.constant 0 : index
      %92 = vector.load %arg5[%c0_45, %c2_46, %c0_47, %c0_48] : memref<1x3x8x128xf32, #tpu.memory_space<vmem>>, vector<1x1x8x128xf32>
      %93 = vector.shape_cast %92 : vector<1x1x8x128xf32> to vector<8x128xf32>
      %94 = vector.shape_cast %91 : vector<8x128xf32> to vector<1x1x8x128xf32>
      tpu.vector_store %arg5[%c0_45, %c2_46, %c0_47, %c0_48], %94 {strides = array<i32>} : memref<1x3x8x128xf32, #tpu.memory_space<vmem>>, vector<1x1x8x128xf32>,
    } else {
    }
    return
  }
  func.func @transform_0(%arg0: i32, %arg1: i32, %arg2: i32) -> (i32, i32, i32) {
    %c1_i32 = arith.constant 1 : i32
    %0 = arith.muli %arg1, %c1_i32 : i32
    %1 = arith.addi %0, %arg2 : i32
    %c0_i32 = arith.constant 0 : i32
    %2 = arith.minsi %1, %c0_i32 : i32
    %c0_i32_0 = arith.constant 0 : i32
    %c0_i32_1 = arith.constant 0 : i32
    return %arg0, %2, %c0_i32_0 : i32, i32, i32
  }
  func.func @transform_1(%arg0: i32, %arg1: i32, %arg2: i32) -> (i32, i32, i32) {
    %c1_i32 = arith.constant 1 : i32
    %0 = arith.muli %arg1, %c1_i32 : i32
    %1 = arith.addi %0, %arg2 : i32
    %c0_i32 = arith.constant 0 : i32
    %2 = arith.minsi %1, %c0_i32 : i32
    %c0_i32_0 = arith.constant 0 : i32
    %c0_i32_1 = arith.constant 0 : i32
    return %arg0, %2, %c0_i32_0 : i32, i32, i32
  }
  func.func @transform_2(%arg0: i32, %arg1: i32, %arg2: i32) -> (i32, i32, i32, i32) {
    %c1_i32 = arith.constant 1 : i32
    %0 = arith.muli %arg0, %c1_i32 : i32
    %1 = arith.addi %0, %arg1 : i32
    %c0_i32 = arith.constant 0 : i32
    %c0_i32_0 = arith.constant 0 : i32
    %c0_i32_1 = arith.constant 0 : i32
    %c0_i32_2 = arith.constant 0 : i32
    return %1, %c0_i32, %c0_i32_0, %c0_i32_1 : i32, i32, i32, i32
  }
}

</mosaic_0001>

<llo_original>
// kernel: tpu_custom_call.1
$region0: #{tpu_custom_call.1}
  #allocation0 [shape = 'u32[]', space=smem, size = 0x4, offset = 0x4, fixed_abs, tag = 'smem constant byte address 0x4 - core index']
  #allocation1 [shape = 'u32[144,128]{1,0:T(1,128)}', space=vmem, size = 0x12000, scoped, tag = 'internal scratch']
  %s0 = inlined_call_operand.hbm [shape: f32[2,8,128], index: 0, kind: input, shape index: {}]
  %s1 = inlined_call_operand.hbm [shape: f32[2,8,128], index: 1, kind: input, shape index: {}]
  %s2 = inlined_call_operand.hbm [shape: f32[2,3,8,128], index: 2, kind: output, shape index: {}]
  %s3 = sld [smem:[#allocation0]]
  $region61: #{tpu_custom_call.1} parent=0
    _
  %s5 = ssub.s32 1, %s3
  %s6 = scalar_select 0, %s5, %s3
  $region1: #{tpu_custom_call.1} parent=0
    #allocation2 [shape = 'u8[8192]{0}', space=vmem, size = 0x2000, scoped, tag = 'input window, operand 0']
    #allocation3 [shape = 's32[2]{0}', space=sflag, size = 0x8, scoped, tag = 'scoped memory for tpu_custom_call.1']
    #allocation4 [shape = 's32[2]{0}', space=sflag, size = 0x8, scoped, tag = 'scoped memory for tpu_custom_call.1']
    #allocation5 [shape = 'u8[8192]{0}', space=vmem, size = 0x2000, scoped, tag = 'input window, operand 1']
    #allocation6 [shape = 's32[2]{0}', space=sflag, size = 0x8, scoped, tag = 'scoped memory for tpu_custom_call.1']
    #allocation7 [shape = 'u8[24576]{0}', space=vmem, size = 0x6000, scoped, tag = 'output window, operand 0']
    %7 = vsyncpa [#allocation3], 0
    %s8 = scalar_lea.sflag [#allocation3], 1
    %9 = vsyncpa %s8, 0
    %10 = vsyncpa [#allocation6], 0
    %s11 = scalar_lea.sflag [#allocation6], 1
    %12 = vsyncpa %s11, 0
    %13 = vsyncpa [#allocation4], 0
    %s14 = scalar_lea.sflag [#allocation4], 1
    %15 = vsyncpa %s14, 0
    loop: start=0, step=1, limit=4
    $region2: #{tpu_custom_call.1} parent=1 // loop_pre_header
      _
    $region3: #{tpu_custom_call.1} parent=1 // loop_header
      %s17 = sphi 0, %s21
      %p18 = scmp.ge.s32.totalorder %s17, 4
      %s24 = sphi 0, %s43
      %s25 = sphi 0, %s39
      %s26 = sphi 0, %s35
      %s27 = sphi 0, %s24
      %s28 = sphi 0, %s25
      %s29 = sphi 0, %s26
      %s30 = sphi 0, %s27
      %s31 = sphi 0, %s28
      %s32 = sphi 0, %s29
      %s54 = sphi 0, %s56
      %s57 = sphi 0, %s54
      %s58 = sphi 0, %s57
      %s74 = sphi 0, %s58
      %s88 = sphi 0, %s90
      %s91 = sphi 0, %s88
      %s92 = sphi 0, %s91
      %s108 = sphi 0, %s92
      %s116 = sphi 0, %s118
      %s119 = sphi 0, %s116
      %s120 = sphi 0, %s119
      %s136 = sphi 0, %s120
    $region4: #{tpu_custom_call.1} parent=1 // loop_header_branch
      %20 = sbr.rel (%p18) target = $region8
    $region5: #{tpu_custom_call.1} parent=1 // loop_body
      %s22 = ssub.s32 %s17, 1
      %s23 = ssub.s32 %s17, 2
      %s33 = sadd.s32 1, %s26
      %p34 = scmp.ge.s32.totalorder %s33, 1
      %s35 = scalar_select %p34, 0, %s33
      %s36 = sadd.s32 1, %s25
      %s37 = scalar_select %p34, %s36, %s25
      %p38 = scmp.ge.s32.totalorder %s37, 1
      %s39 = scalar_select %p38, 0, %s37
      %s40 = sadd.s32 1, %s24
      %s41 = scalar_select %p38, %s40, %s24
      %p42 = scmp.ge.s32.totalorder %s41, 2
      %s43 = scalar_select %p42, 0, %s41
      %s44 = sadd.s32 %s25, %s26
      %p45 = scmp.lt.s32.totalorder %s44, 0
      %s46 = scalar_select %p45, %s44, 0
      %s47 = sadd.s32 %s39, %s35
      %p48 = scmp.lt.s32.totalorder %s47, 0
      %s49 = scalar_select %p48, %s47, 0
      %s50 = ssub.s32 %s24, %s43
      %s51 = ssub.s32 %s46, %s49
      %s52 = sor.u32 %s50, %s51
      %p53 = scmp.eq.s32.totalorder %s52, 0
      %s55 = sadd.s32 %s54, 1
      %s56 = scalar_select %p53, %s54, %s55
      %p59 = pneg %p53
      %p60 = scmp.eq.s32.totalorder %s17, 1
      %p61 = por %p59, %p60
      %p62 = scmp.ne.s32.totalorder %s54, %s57
      %p63 = scmp.eq.s32.totalorder %s17, 0
      %p64 = por %p62, %p63
      %p65 = scmp.ne.s32.totalorder %s54, %s57
      %p66 = scmp.eq.s32.totalorder %s22, 1
      %p67 = por %p65, %p66
      %p68 = scmp.ne.s32.totalorder %s57, %s58
      %p69 = scmp.eq.s32.totalorder %s22, 0
      %p70 = por %p68, %p69
      %p71 = scmp.ne.s32.totalorder %s57, %s58
      %p72 = scmp.eq.s32.totalorder %s23, 1
      %p73 = por %p71, %p72
      %p75 = scmp.ne.s32.totalorder %s58, %s74
      %p76 = scmp.eq.s32.totalorder %s23, 0
      %p77 = por %p75, %p76
      %s78 = sadd.s32 %s25, %s26
      %p79 = scmp.lt.s32.totalorder %s78, 0
      %s80 = scalar_select %p79, %s78, 0
      %s81 = sadd.s32 %s39, %s35
      %p82 = scmp.lt.s32.totalorder %s81, 0
      %s83 = scalar_select %p82, %s81, 0
      %s84 = ssub.s32 %s24, %s43
      %s85 = ssub.s32 %s80, %s83
      %s86 = sor.u32 %s84, %s85
      %p87 = scmp.eq.s32.totalorder %s86, 0
      %s89 = sadd.s32 %s88, 1
      %s90 = scalar_select %p87, %s88, %s89
      %p93 = pneg %p87
      %p94 = scmp.eq.s32.totalorder %s17, 1
      %p95 = por %p93, %p94
      %p96 = scmp.ne.s32.totalorder %s88, %s91
      %p97 = scmp.eq.s32.totalorder %s17, 0
      %p98 = por %p96, %p97
      %p99 = scmp.ne.s32.totalorder %s88, %s91
      %p100 = scmp.eq.s32.totalorder %s22, 1
      %p101 = por %p99, %p100
      %p102 = scmp.ne.s32.totalorder %s91, %s92
      %p103 = scmp.eq.s32.totalorder %s22, 0
      %p104 = por %p102, %p103
      %p105 = scmp.ne.s32.totalorder %s91, %s92
      %p106 = scmp.eq.s32.totalorder %s23, 1
      %p107 = por %p105, %p106
      %p109 = scmp.ne.s32.totalorder %s92, %s108
      %p110 = scmp.eq.s32.totalorder %s23, 0
      %p111 = por %p109, %p110
      %s112 = sadd.s32 %s24, %s25
      %s113 = sadd.s32 %s43, %s39
      %s114 = ssub.s32 %s112, %s113
      %p115 = scmp.eq.s32.totalorder %s114, 0
      %s117 = sadd.s32 %s116, 1
      %s118 = scalar_select %p115, %s116, %s117
      %p121 = pneg %p115
      %p122 = scmp.eq.s32.totalorder %s17, 1
      %p123 = por %p121, %p122
      %p124 = scmp.ne.s32.totalorder %s116, %s119
      %p125 = scmp.eq.s32.totalorder %s17, 0
      %p126 = por %p124, %p125
      %p127 = scmp.ne.s32.totalorder %s116, %s119
      %p128 = scmp.eq.s32.totalorder %s22, 1
      %p129 = por %p127, %p128
      %p130 = scmp.ne.s32.totalorder %s119, %s120
      %p131 = scmp.eq.s32.totalorder %s22, 0
      %p132 = por %p130, %p131
      %p133 = scmp.ne.s32.totalorder %s119, %s120
      %p134 = scmp.eq.s32.totalorder %s23, 1
      %p135 = por %p133, %p134
      %p137 = scmp.ne.s32.totalorder %s120, %s136
      %p138 = scmp.eq.s32.totalorder %s23, 0
      %p139 = por %p137, %p138
      %p140 = scmp.le.s32.totalorder 1, %s17
      %p141 = scmp.lt.s32.totalorder %s17, 3
      %p142 = pnand %p140, %p141
      %p143 = pneg %p142
      // Predicated region
      $region9: #{tpu_custom_call.1} parent=5 // pred_check
        _
      $region10: #{tpu_custom_call.1} parent=5 // pred_check_branch
        %145 = sbr.rel (%p142) target = $region12
      $region11: #{tpu_custom_call.1} parent=5 // pred_region
        %s146 = ssub.s32 %s17, 1
      $region12: #{tpu_custom_call.1} parent=5 // pred_fallthru
        _
      %p147 = scmp.lt.s32.totalorder %s17, 2
      // Predicated region
      $region13: #{tpu_custom_call.1} parent=5 // pred_check
        %p148 = pneg %p147
      $region14: #{tpu_custom_call.1} parent=5 // pred_check_branch
        %150 = sbr.rel (%p148) target = $region16
      $region15: #{tpu_custom_call.1} parent=5 // pred_region
        // Predicated region
        $region17: #{tpu_custom_call.1} parent=15 // pred_check
          %p151 = pneg %p64
        $region18: #{tpu_custom_call.1} parent=15 // pred_check_branch
          %153 = sbr.rel (%p151) target = $region20
        $region19: #{tpu_custom_call.1} parent=15 // pred_region
          %s154 = sand.u32 %s54, 1
          %s155 = scalar_lea.sflag [#allocation3], %s154
          %s156 = sand.u32 %s54, 1
          %s157 = smul.addr %s156, 8
          %s158 = scalar_lea.vmem [#allocation2], %s157
          %s159 = sadd.s32 %s25, %s26
          %p160 = scmp.lt.s32.totalorder %s159, 0
          %s161 = scalar_select %p160, %s159, 0
          %s163 = ssub.s32 128, 128
          %164 = vsyncadd %s155, %s163
          %s165 = sadd.s32 %s161, %s24
          %s166 = smul.addr %s165, 128
          %s167 = scalar_lea.hbm %s0, %s166
          %s169 = sshll.u32 %s158, 4
          %s170 = int_to_ptr.vmem [resolvable:$true] %s169
          %172 = dma.hbm_to_vmem [thread:$0]  %s167, 128, %s170, %s155
        $region20: #{tpu_custom_call.1} parent=15 // pred_fallthru
          _
        // Predicated region
        $region21: #{tpu_custom_call.1} parent=15 // pred_check
          %p173 = pneg %p98
        $region22: #{tpu_custom_call.1} parent=15 // pred_check_branch
          %175 = sbr.rel (%p173) target = $region24
        $region23: #{tpu_custom_call.1} parent=15 // pred_region
          %s176 = sand.u32 %s88, 1
          %s177 = scalar_lea.sflag [#allocation6], %s176
          %s178 = sand.u32 %s88, 1
          %s179 = smul.addr %s178, 8
          %s180 = scalar_lea.vmem [#allocation5], %s179
          %s181 = sadd.s32 %s25, %s26
          %p182 = scmp.lt.s32.totalorder %s181, 0
          %s183 = scalar_select %p182, %s181, 0
          %s185 = ssub.s32 128, 128
          %186 = vsyncadd %s177, %s185
          %s187 = sadd.s32 %s183, %s24
          %s188 = smul.addr %s187, 128
          %s189 = scalar_lea.hbm %s1, %s188
          %s191 = sshll.u32 %s180, 4
          %s192 = int_to_ptr.vmem [resolvable:$true] %s191
          %194 = dma.hbm_to_vmem [thread:$0]  %s189, 128, %s192, %s177
        $region24: #{tpu_custom_call.1} parent=15 // pred_fallthru
          _
      $region16: #{tpu_custom_call.1} parent=5 // pred_fallthru
        _
      %p195 = scmp.le.s32.totalorder 1, %s17
      %p196 = scmp.lt.s32.totalorder %s17, 3
      %p197 = pnand %p195, %p196
      %p198 = pneg %p197
      // Predicated region
      $region25: #{tpu_custom_call.1} parent=5 // pred_check
        _
      $region26: #{tpu_custom_call.1} parent=5 // pred_check_branch
        %200 = sbr.rel (%p197) target = $region28
      $region27: #{tpu_custom_call.1} parent=5 // pred_region
        %s201 = ssub.s32 %s17, 1
        %s202 = sand.u32 %s57, 1
        %s203 = scalar_lea.sflag [#allocation3], %s202
        %s204 = sand.u32 %s57, 1
        %s205 = smul.addr %s204, 8
        %s206 = scalar_lea.vmem [#allocation2], %s205
        // Predicated region
        $region29: #{tpu_custom_call.1} parent=27 // pred_check
          %p207 = pneg %p70
        $region30: #{tpu_custom_call.1} parent=27 // pred_check_branch
          %209 = sbr.rel (%p207) target = $region32
        $region31: #{tpu_custom_call.1} parent=27 // pred_region
          %210 = dma.done %s203, 128
        $region32: #{tpu_custom_call.1} parent=27 // pred_fallthru
          _
        %s211 = sand.u32 %s91, 1
        %s212 = scalar_lea.sflag [#allocation6], %s211
        %s213 = sand.u32 %s91, 1
        %s214 = smul.addr %s213, 8
        %s215 = scalar_lea.vmem [#allocation5], %s214
        // Predicated region
        $region33: #{tpu_custom_call.1} parent=27 // pred_check
          %p216 = pneg %p104
        $region34: #{tpu_custom_call.1} parent=27 // pred_check_branch
          %218 = sbr.rel (%p216) target = $region36
        $region35: #{tpu_custom_call.1} parent=27 // pred_region
          %219 = dma.done %s212, 128
        $region36: #{tpu_custom_call.1} parent=27 // pred_fallthru
          _
        %s220 = sand.u32 %s57, 1
        %s221 = scalar_lea.sflag [#allocation3], %s220
        %s222 = sand.u32 %s57, 1
        %s223 = smul.addr %s222, 8
        %s224 = scalar_lea.vmem [#allocation2], %s223
        %p225 = pneg %p70
        %p226 = pneg %p67
        %s227 = sand.u32 %s91, 1
        %s228 = scalar_lea.sflag [#allocation6], %s227
        %s229 = sand.u32 %s91, 1
        %s230 = smul.addr %s229, 8
        %s231 = scalar_lea.vmem [#allocation5], %s230
        %p232 = pneg %p104
        %p233 = pneg %p101
        %p234 = pneg %p132
        %p235 = pneg %p129
        %s236 = sand.u32 %s119, 1
        %s237 = scalar_lea.sflag [#allocation4], %s236
        %s238 = sand.u32 %s119, 1
        %s239 = smul.addr %s238, 24
        %s240 = scalar_lea.vmem [#allocation7], %s239
        %s241 = sadd.s32 %s28, %s29
        %p242 = scmp.lt.s32.totalorder %s241, 0
        %s243 = scalar_select %p242, %s241, 0
        %s244 = sadd.s32 %s28, %s29
        %p245 = scmp.lt.s32.totalorder %s244, 0
        %s246 = scalar_select %p245, %s244, 0
        %s247 = sadd.s32 %s27, %s28
        %p248 = scmp.eq.s32.totalorder %s29, 0
        // Predicated region
        $region37: #{tpu_custom_call.1} parent=27 // pred_check
          %p249 = pneg %p248
        $region38: #{tpu_custom_call.1} parent=27 // pred_check_branch
          %251 = sbr.rel (%p249) target = $region40
        $region39: #{tpu_custom_call.1} parent=27 // pred_region
          %252 = vst [vmem:[%s240] sm:$0xff] 0.0
          %253 = vst [vmem:[%s240 + $0x8] sm:$0xff] 0.0
          %254 = vst [vmem:[%s240 + $0x10] sm:$0xff] 0.0
        $region40: #{tpu_custom_call.1} parent=27 // pred_fallthru
          _
        %v255 = vld [vmem:[%s206] sm:$0xff]
        %v256 = vld [vmem:[%s215] sm:$0xff]
        %s257 = sadd.s32 %s28, %s29
        %s258 = sadd.s32 %s257, 1
        %s259 = smul.u32 %s258, 1024
        %p260 = scmp.gt.s32.totalorder %s259, 256
        %p261 = scmp.le.s32.totalorder %s259, 256
        // Predicated region
        $region41: #{tpu_custom_call.1} parent=27 // pred_check
          %p262 = pneg %p261
        $region42: #{tpu_custom_call.1} parent=27 // pred_check_branch
          %264 = sbr.rel (%p262) target = $region44
        $region43: #{tpu_custom_call.1} parent=27 // pred_region
          %v265 = vand.u32 2147483647, %v255
          %v266 = vsub.f32 0.0, %v265
          %v267 = vmul.f32 %v266, 1.442695
          %v268 = vpow.pop %v267
          %v269 = vadd.f32 %v268, 1.0
          %v270 = vlog2.pop %v269
          %v271 = vmul.f32 %v270, 0.6931472
          %v272 = vmul.f32 -0.5, %v268
          %v273 = vadd.f32 %v272, 1.0
          %v274 = vmul.f32 %v273, %v268
          %v275 = vand.u32 2147483647, %v268
          %vm276 = vcmp.lt.f32.partialorder %v275, 0.0004427343
          %v277 = vsel %vm276, %v274, %v271
          %v278 = vmax.f32 %v255, 0.0
          %v279 = vsub.f32 0.0, %v255
          %v280 = vmax.f32 %v279, 0.0
          %v281 = vadd.f32 %v256, 1.0
          %v282 = vmul.f32 %v281, %v277
          %v283 = vmul.f32 %v256, 2.0
          %v284 = vmul.f32 %v283, %v280
          %v285 = vadd.f32 %v282, %v284
          %v286 = vsub.f32 1.0, %v256
          %v287 = vmul.f32 %v286, %v278
          %v288 = vadd.f32 %v285, %v287
          %v289 = vadd.f32 %v268, 1.0
          %v290 = vrcp.pop %v289
          %v291 = vmul.f32 %v289, %v290
          %v292 = vsub.f32 2.0, %v291
          %v293 = vmul.f32 %v290, %v292
          %vm294 = vcmp.ge.f32.partialorder %v255, 0.0
          %v295 = vmul.f32 %v268, %v293
          %v296 = vsel %vm294, %v293, %v295
          %v297 = vmul.f32 %v296, %v256
          %v298 = vadd.f32 %v296, %v256
          %v299 = vld [vmem:[%s240] sm:$0xff]
          %v300 = vadd.f32 %v288, 0.0
          %v301 = vadd.f32 %v299, %v300
          %302 = vst [vmem:[%s240] sm:$0xff] %v301
          %s303 = scalar_lea.vmem %s240, 8 [#allocation7]
          %v304 = vld [vmem:[%s303] sm:$0xff]
          %v305 = vadd.f32 %v297, 0.0
          %v306 = vadd.f32 %v304, %v305
          %307 = vst [vmem:[%s303] sm:$0xff] %v306
          %s308 = scalar_lea.vmem %s240, 16 [#allocation7]
          %v309 = vld [vmem:[%s308] sm:$0xff]
          %v310 = vadd.f32 %v298, 0.0
          %v311 = vadd.f32 %v309, %v310
          %312 = vst [vmem:[%s308] sm:$0xff] %v311
        $region44: #{tpu_custom_call.1} parent=27 // pred_fallthru
          _
        // Predicated region
        $region45: #{tpu_custom_call.1} parent=27 // pred_check
          %p313 = pneg %p260
        $region46: #{tpu_custom_call.1} parent=27 // pred_check_branch
          %315 = sbr.rel (%p313) target = $region48
        $region47: #{tpu_custom_call.1} parent=27 // pred_region
          %v316 = vlaneseq
          %v317 = vshrl.u32 %v316, 7
          %v318 = vlaneseq
          %v319 = vand.u32 %v318, 127
          %s320 = smul.u32 %s257, 8
          %v321 = vstv %s320
          %v322 = vadd.s32 %v321, %v317
          %v323 = vmul.u32 %v322, 128
          %v324 = vadd.s32 %v323, %v319
          %vm325 = vcmp.lt.s32.totalorder %v324, 256
          %v326 = vand.u32 2147483647, %v255
          %v327 = vsub.f32 0.0, %v326
          %v328 = vmul.f32 %v327, 1.442695
          %v329 = vpow.pop %v328
          %v330 = vadd.f32 %v329, 1.0
          %v331 = vlog2.pop %v330
          %v332 = vmul.f32 %v331, 0.6931472
          %v333 = vmul.f32 -0.5, %v329
          %v334 = vadd.f32 %v333, 1.0
          %v335 = vmul.f32 %v334, %v329
          %v336 = vand.u32 2147483647, %v329
          %vm337 = vcmp.lt.f32.partialorder %v336, 0.0004427343
          %v338 = vsel %vm337, %v335, %v332
          %v339 = vmax.f32 %v255, 0.0
          %v340 = vsub.f32 0.0, %v255
          %v341 = vmax.f32 %v340, 0.0
          %v342 = vadd.f32 %v256, 1.0
          %v343 = vmul.f32 %v342, %v338
          %v344 = vmul.f32 %v256, 2.0
          %v345 = vmul.f32 %v344, %v341
          %v346 = vadd.f32 %v343, %v345
          %v347 = vsub.f32 1.0, %v256
          %v348 = vmul.f32 %v347, %v339
          %v349 = vadd.f32 %v346, %v348
          %v350 = vadd.f32 %v329, 1.0
          %v351 = vrcp.pop %v350
          %v352 = vmul.f32 %v350, %v351
          %v353 = vsub.f32 2.0, %v352
          %v354 = vmul.f32 %v351, %v353
          %vm355 = vcmp.ge.f32.partialorder %v255, 0.0
          %v356 = vmul.f32 %v329, %v354
          %v357 = vsel %vm355, %v354, %v356
          %v358 = vmul.f32 %v357, %v256
          %v359 = vadd.f32 %v357, %v256
          %v360 = vsel %vm325, %v349, 0.0
          %v361 = vsel %vm325, %v358, 0.0
          %v362 = vsel %vm325, %v359, 0.0
          %v363 = vld [vmem:[%s240] sm:$0xff]
          %v364 = vadd.f32 %v360, 0.0
          %v365 = vadd.f32 %v363, %v364
          %366 = vst [vmem:[%s240] sm:$0xff] %v365
          %s367 = scalar_lea.vmem %s240, 8 [#allocation7]
          %v368 = vld [vmem:[%s367] sm:$0xff]
          %v369 = vadd.f32 %v361, 0.0
          %v370 = vadd.f32 %v368, %v369
          %371 = vst [vmem:[%s367] sm:$0xff] %v370
          %s372 = scalar_lea.vmem %s240, 16 [#allocation7]
          %v373 = vld [vmem:[%s372] sm:$0xff]
          %v374 = vadd.f32 %v362, 0.0
          %v375 = vadd.f32 %v373, %v374
          %376 = vst [vmem:[%s372] sm:$0xff] %v375
        $region48: #{tpu_custom_call.1} parent=27 // pred_fallthru
          _
        %s377 = sand.u32 %s119, 1
        %s378 = scalar_lea.sflag [#allocation4], %s377
        %s379 = sand.u32 %s119, 1
        %s380 = smul.addr %s379, 24
        %s381 = scalar_lea.vmem [#allocation7], %s380
        // Predicated region
        $region49: #{tpu_custom_call.1} parent=27 // pred_check
          %p382 = pneg %p129
        $region50: #{tpu_custom_call.1} parent=27 // pred_check_branch
          %384 = sbr.rel (%p382) target = $region52
        $region51: #{tpu_custom_call.1} parent=27 // pred_region
          %s385 = sadd.s32 %s27, %s28
          %s387 = ssub.s32 384, 384
          %388 = vsyncadd %s378, %s387
          %s389 = smul.addr %s385, 3
          %s390 = smul.addr %s389, 128
          %s391 = scalar_lea.hbm %s2, %s390
          %s392 = sshll.u32 %s381, 4
          %s393 = int_to_ptr.vmem [resolvable:$true] %s392
          %398 = dma.vmem_to_hbm [thread:$0]  %s393, 384, %s391, %s378, 128, 128, 8
        $region52: #{tpu_custom_call.1} parent=27 // pred_fallthru
          _
      $region28: #{tpu_custom_call.1} parent=5 // pred_fallthru
        _
      %p399 = scmp.le.s32.totalorder 2, %s17
      // Predicated region
      $region53: #{tpu_custom_call.1} parent=5 // pred_check
        %p400 = pneg %p399
      $region54: #{tpu_custom_call.1} parent=5 // pred_check_branch
        %402 = sbr.rel (%p400) target = $region56
      $region55: #{tpu_custom_call.1} parent=5 // pred_region
        %s403 = ssub.s32 %s17, 2
        // Predicated region
        $region57: #{tpu_custom_call.1} parent=55 // pred_check
          %p404 = pneg %p135
        $region58: #{tpu_custom_call.1} parent=55 // pred_check_branch
          %406 = sbr.rel (%p404) target = $region60
        $region59: #{tpu_custom_call.1} parent=55 // pred_region
          %s407 = sand.u32 %s120, 1
          %s408 = scalar_lea.sflag [#allocation4], %s407
          %s409 = sand.u32 %s120, 1
          %s410 = smul.addr %s409, 24
          %s411 = scalar_lea.vmem [#allocation7], %s410
          %412 = dma.done %s408, 384
        $region60: #{tpu_custom_call.1} parent=55 // pred_fallthru
          _
      $region56: #{tpu_custom_call.1} parent=5 // pred_fallthru
        _
    $region6: #{tpu_custom_call.1} parent=1 // loop_footer
      %s21 = sadd.s32 1, %s17
    $region7: #{tpu_custom_call.1} parent=1 // loop_footer_branch
      %16 = sbr.rel target = $region3
    $region8: #{tpu_custom_call.1} parent=1 // loop_exit
      _
    %413 = vsyncpa [#allocation3], 1
    %s414 = scalar_lea.sflag [#allocation3], 1
    %415 = vsyncpa %s414, 1
    %416 = vsyncpa [#allocation6], 1
    %s417 = scalar_lea.sflag [#allocation6], 1
    %418 = vsyncpa %s417, 1
    %419 = vsyncpa [#allocation4], 1
    %s420 = scalar_lea.sflag [#allocation4], 1
    %421 = vsyncpa %s420, 1

</llo_original>
